<compile_context>
chip_gen: v7x
topology: tpu7x:2x2x1
jax: 0.10.0
libtpu: 0.0.40
codegen_flags: <defaults>
</compile_context>

<pallas_src>
import functools

import jax
import jax.numpy as jnp
from jax.experimental import pallas as pl
from jax.experimental.pallas import tpu as pltpu


def _mlp_kernel(*refs, keep_threshold, inv_keep_prob, apply_dropout):
    if apply_dropout:
        x_ref, bits_ref, w_ref, b_ref, o_ref, acc_ref = refs
    else:
        x_ref, w_ref, b_ref, o_ref, acc_ref = refs
        bits_ref = None

    k = pl.program_id(2)

    @pl.when(k == 0)
    def _init():
        acc_ref[...] = jnp.zeros_like(acc_ref)

    x = x_ref[...]                       # native dtype straight to the MXU
    if apply_dropout:
        # keep = (u >= p) with u the raw uint32 draw: one compare + select,
        # no shift/convert/multiply.  Survivor scaling is deferred to finalize.
        keep = bits_ref[...] >= jnp.uint32(keep_threshold)
        x = jnp.where(keep, x, jnp.zeros_like(x))

    acc_ref[...] += jnp.dot(x, w_ref[...], preferred_element_type=jnp.float32)

    @pl.when(k == pl.num_programs(2) - 1)
    def _finalize():
        y = acc_ref[...]
        if apply_dropout:
            y = y * jnp.float32(inv_keep_prob)   # B*Dout muls once, not B*Din per pass
        y = y + b_ref[...].astype(jnp.float32)   # bias only on the last K step
        o_ref[...] = y.astype(o_ref.dtype)


def _pick_tile(dim, preferred):
    """Use the preferred tile if it divides the dim, else fall back to the full
    dimension (always legal for BlockSpec's (8,128) rule)."""
    return preferred if dim % preferred == 0 else dim


def mlp_forward(x, w_t, b, *, dropout_rate, dropout_bits=None, training=True,
                tm=128, tn=128, tk=256):
    """x: (B, Din); w_t: (Din, Dout) = Linear weight pre-transposed; b: (1, Dout).
    dropout_bits: (B, Din) uint32 raw random bits (required when training and
    dropout_rate > 0)."""
    B, Din = x.shape
    Dout = w_t.shape[1]
    assert w_t.shape == (Din, Dout)
    assert b.shape == (1, Dout)

    rate = float(dropout_rate)
    apply_dropout = bool(training) and rate > 0.0
    if apply_dropout:
        assert dropout_bits is not None and dropout_bits.shape == (B, Din)
        assert dropout_bits.dtype == jnp.uint32
        keep_threshold = min(int(round(rate * 2.0 ** 32)), 2 ** 32 - 1)
        inv_keep_prob = 1.0 / (1.0 - rate)
    else:
        keep_threshold = 0
        inv_keep_prob = 1.0

    # Lane-dense N tile (multiple of 128 when Dout allows), sublane-aligned M,
    # K-major reduction as the last grid axis.
    TM = _pick_tile(B, tm)
    TN = _pick_tile(Dout, tn)
    TK = _pick_tile(Din, tk)
    grid = (B // TM, Dout // TN, Din // TK)

    in_specs = [pl.BlockSpec((TM, TK), lambda i, j, k: (i, k))]        # x
    args = [x]
    if apply_dropout:
        in_specs.append(pl.BlockSpec((TM, TK), lambda i, j, k: (i, k)))  # bits
        args.append(dropout_bits)
    in_specs.append(pl.BlockSpec((TK, TN), lambda i, j, k: (k, j)))    # W^T
    args.append(w_t)
    in_specs.append(pl.BlockSpec((1, TN), lambda i, j, k: (0, j)))     # bias
    args.append(b)

    kernel = functools.partial(
        _mlp_kernel,
        keep_threshold=keep_threshold,
        inv_keep_prob=inv_keep_prob,
        apply_dropout=apply_dropout,
    )

    bytes_accessed = (
        x.size * x.dtype.itemsize
        + w_t.size * w_t.dtype.itemsize
        + b.size * b.dtype.itemsize
        + B * Dout * x.dtype.itemsize
    )
    if apply_dropout:
        bytes_accessed += dropout_bits.size * 4

    return pl.pallas_call(
        kernel,
        out_shape=jax.ShapeDtypeStruct((B, Dout), x.dtype),
        grid=grid,
        in_specs=in_specs,
        out_specs=pl.BlockSpec((TM, TN), lambda i, j, k: (i, j)),
        scratch_shapes=[pltpu.VMEM((TM, TN), jnp.float32)],
        compiler_params=pltpu.CompilerParams(
            dimension_semantics=("parallel", "parallel", "arbitrary")),
        cost_estimate=pl.CostEstimate(
            flops=2 * B * Din * Dout,
            transcendentals=0,
            bytes_accessed=int(bytes_accessed)),
    )(*args)


if __name__ == "__main__":
    # Small but tiling-exercising problem: grid = (1, 2, 2).
    B = 128
    input_dim = 512
    output_dim = 256
    dropout_rate = 0.1

    key = jax.random.PRNGKey(0)
    kx, kw, kb, kd = jax.random.split(key, 4)

    x = jax.random.normal(kx, (B, input_dim), dtype=jnp.float32)

    # Deterministic parameter init (mimics nn.Linear's uniform init bounds).
    bound = 1.0 / (input_dim ** 0.5)
    w = jax.random.uniform(kw, (output_dim, input_dim), jnp.float32, -bound, bound)
    b = jax.random.uniform(kb, (output_dim,), jnp.float32, -bound, bound)

    w_t = jnp.transpose(w)               # (Din, Dout) so the kernel does x @ W^T
    b2d = b.reshape(1, output_dim)

    # Raw uint32 random bits for the dropout mask (one draw per x element).
    bits = jax.random.bits(kd, (B, input_dim), dtype=jnp.uint32)

    # Training mode (dropout active).
    out_train = mlp_forward(x, w_t, b2d, dropout_rate=dropout_rate,
                            dropout_bits=bits, training=True)
    jax.block_until_ready(out_train)

    threshold = jnp.uint32(min(int(round(dropout_rate * 2.0 ** 32)), 2 ** 32 - 1))
    keep = bits >= threshold
    ref_train = (jnp.where(keep, x, 0.0) @ w_t) * (1.0 / (1.0 - dropout_rate)) + b2d
    assert out_train.shape == (B, output_dim)
    assert jnp.allclose(out_train, ref_train, atol=2e-2, rtol=2e-2)

    # Eval mode (dropout = identity).
    out_eval = mlp_forward(x, w_t, b2d, dropout_rate=dropout_rate, training=False)
    jax.block_until_ready(out_eval)
    ref_eval = x @ w_t + b2d
    assert jnp.allclose(out_eval, ref_eval, atol=2e-2, rtol=2e-2)

    print("KERNEL_OK")
</pallas_src>

<mosaic_0001>
module attributes {stable_mosaic.version = 11 : i64} {
  func.func @_mlp_kernel(%arg0: i32, %arg1: i32, %arg2: i32, %arg3: memref<128x256xf32, #tpu.memory_space<vmem>>, %arg4: memref<128x256xi32, #tpu.memory_space<vmem>>, %arg5: memref<256x128xf32, #tpu.memory_space<vmem>>, %arg6: memref<1x128xf32, #tpu.memory_space<vmem>>, %arg7: memref<128x128xf32, #tpu.memory_space<vmem>>, %arg8: memref<128x128xf32, #tpu.memory_space<vmem>>) attributes {dimension_semantics = [#tpu.dimension_semantics<parallel>, #tpu.dimension_semantics<parallel>, #tpu.dimension_semantics<arbitrary>], iteration_bounds = array<i64: 1, 2, 2>, scalar_prefetch = 0 : i64, scratch_operands = 1 : i64, tpu.core_type = #tpu.core_type<tc>, window_params = [{transform_indices = @transform_0, window_bounds = array<i64: 128, 256>}, {transform_indices = @transform_1, window_bounds = array<i64: 128, 256>}, {transform_indices = @transform_2, window_bounds = array<i64: 256, 128>}, {transform_indices = @transform_3, window_bounds = array<i64: 1, 128>}, {transform_indices = @transform_4, window_bounds = array<i64: 128, 128>}]} {
    %c0_i32 = arith.constant 0 : i32
    %0 = arith.cmpi eq, %arg2, %c0_i32 : i32
    %1 = arith.extui %0 : i1 to i32
    %c0_i32_0 = arith.constant 0 : i32
    %2 = arith.cmpi ne, %1, %c0_i32_0 : i32
    scf.if %2 {
      %cst_12 = arith.constant 0.000000e+00 : f32
      %17 = vector.broadcast %cst_12 : f32 to vector<128x128xf32>
      %c0_13 = arith.constant 0 : index
      %c0_14 = arith.constant 0 : index
      %18 = vector.load %arg8[%c0_13, %c0_14] : memref<128x128xf32, #tpu.memory_space<vmem>>, vector<128x128xf32>
      tpu.vector_store %arg8[%c0_13, %c0_14], %17 {strides = array<i32>} : memref<128x128xf32, #tpu.memory_space<vmem>>, vector<128x128xf32>,
    } else {
    }
    %c0 = arith.constant 0 : index
    %c0_1 = arith.constant 0 : index
    %3 = vector.load %arg3[%c0, %c0_1] : memref<128x256xf32, #tpu.memory_space<vmem>>, vector<128x256xf32>
    %c0_2 = arith.constant 0 : index
    %c0_3 = arith.constant 0 : index
    %4 = vector.load %arg4[%c0_2, %c0_3] : memref<128x256xi32, #tpu.memory_space<vmem>>, vector<128x256xi32>
    %c429496730_i32 = arith.constant 429496730 : i32
    %5 = vector.broadcast %c429496730_i32 : i32 to vector<128x256xi32>
    %6 = arith.cmpi uge, %4, %5 : vector<128x256xi32>
    %cst = arith.constant 0.000000e+00 : f32
    %7 = vector.broadcast %cst : f32 to vector<128x256xf32>
    %8 = arith.select %6, %3, %7 : vector<128x256xi1>, vector<128x256xf32>
    %c0_4 = arith.constant 0 : index
    %c0_5 = arith.constant 0 : index
    %9 = vector.load %arg8[%c0_4, %c0_5] : memref<128x128xf32, #tpu.memory_space<vmem>>, vector<128x128xf32>
    %c0_6 = arith.constant 0 : index
    %c0_7 = arith.constant 0 : index
    %10 = vector.load %arg5[%c0_6, %c0_7] : memref<256x128xf32, #tpu.memory_space<vmem>>, vector<256x128xf32>
    %cst_8 = arith.constant dense<0.000000e+00> : vector<128x128xf32>
    %11 = tpu.matmul %8, %10, %cst_8 {dimension_numbers = #tpu.dot_dimension_numbers<[1], [0], [0], [1], [0, 0, 1, 1], [], []>} : vector<128x256xf32>, vector<256x128xf32>, vector<128x128xf32> -> vector<128x128xf32>
    %12 = arith.addf %9, %11 : vector<128x128xf32>
    %c0_9 = arith.constant 0 : index
    %c0_10 = arith.constant 0 : index
    %13 = vector.load %arg8[%c0_9, %c0_10] : memref<128x128xf32, #tpu.memory_space<vmem>>, vector<128x128xf32>
    tpu.vector_store %arg8[%c0_9, %c0_10], %12 {strides = array<i32>} : memref<128x128xf32, #tpu.memory_space<vmem>>, vector<128x128xf32>,
    %c1_i32 = arith.constant 1 : i32
    %14 = arith.cmpi eq, %arg2, %c1_i32 : i32
    %15 = arith.extui %14 : i1 to i32
    %c0_i32_11 = arith.constant 0 : i32
    %16 = arith.cmpi ne, %15, %c0_i32_11 : i32
    scf.if %16 {
      %c0_12 = arith.constant 0 : index
      %c0_13 = arith.constant 0 : index
      %17 = vector.load %arg8[%c0_12, %c0_13] : memref<128x128xf32, #tpu.memory_space<vmem>>, vector<128x128xf32>
      %cst_14 = arith.constant 1.11111116 : f32
      %18 = vector.broadcast %cst_14 : f32 to vector<128x128xf32>
      %19 = arith.mulf %17, %18 : vector<128x128xf32>
      %c0_15 = arith.constant 0 : index
      %c0_16 = arith.constant 0 : index
      %20 = vector.load %arg6[%c0_15, %c0_16] : memref<1x128xf32, #tpu.memory_space<vmem>>, vector<1x128xf32>
      %21 = vector.broadcast %20 : vector<1x128xf32> to vector<128x128xf32>
      %22 = arith.addf %19, %21 : vector<128x128xf32>
      %c0_17 = arith.constant 0 : index
      %c0_18 = arith.constant 0 : index
      %23 = vector.load %arg7[%c0_17, %c0_18] : memref<128x128xf32, #tpu.memory_space<vmem>>, vector<128x128xf32>
      tpu.vector_store %arg7[%c0_17, %c0_18], %22 {strides = array<i32>} : memref<128x128xf32, #tpu.memory_space<vmem>>, vector<128x128xf32>,
    } else {
    }
    return
  }
  func.func @transform_0(%arg0: i32, %arg1: i32, %arg2: i32) -> (i32, i32) {
    %c0_i32 = arith.constant 0 : i32
    return %arg0, %arg2 : i32, i32
  }
  func.func @transform_1(%arg0: i32, %arg1: i32, %arg2: i32) -> (i32, i32) {
    %c0_i32 = arith.constant 0 : i32
    return %arg0, %arg2 : i32, i32
  }
  func.func @transform_2(%arg0: i32, %arg1: i32, %arg2: i32) -> (i32, i32) {
    %c0_i32 = arith.constant 0 : i32
    return %arg2, %arg1 : i32, i32
  }
  func.func @transform_3(%arg0: i32, %arg1: i32, %arg2: i32) -> (i32, i32) {
    %c0_i32 = arith.constant 0 : i32
    %c0_i32_0 = arith.constant 0 : i32
    return %c0_i32, %arg1 : i32, i32
  }
  func.func @transform_4(%arg0: i32, %arg1: i32, %arg2: i32) -> (i32, i32) {
    %c0_i32 = arith.constant 0 : i32
    return %arg0, %arg1 : i32, i32
  }
}

</mosaic_0001>

<llo_original>
// kernel: tpu_custom_call.1
$region0: #{tpu_custom_call.1}
  #allocation0 [shape = 'u32[]', space=smem, size = 0x4, offset = 0x4, fixed_abs, tag = 'smem constant byte address 0x4 - core index']
  #allocation1 [shape = 'u32[144,128]{1,0:T(1,128)}', space=vmem, size = 0x12000, scoped, tag = 'internal scratch']
  #allocation2 [shape = 'f32[128,128]{1,0:T(8,128)}', space=vmem, size = 0x10000, scoped, tag = 'scratch operand']
  %s0 = inlined_call_operand.hbm [shape: f32[128,512], index: 0, kind: input, shape index: {}]
  %s1 = inlined_call_operand.hbm [shape: u32[128,512], index: 1, kind: input, shape index: {}]
  %s2 = inlined_call_operand.hbm [shape: f32[512,256], index: 2, kind: input, shape index: {}]
  %s3 = inlined_call_operand.vmem [shape: f32[1,256], index: 3, kind: input, shape index: {}]
  %s4 = inlined_call_operand.hbm [shape: f32[128,256], index: 4, kind: output, shape index: {}]
  %s5 = sld [smem:[#allocation0]]
  $region69: #{tpu_custom_call.1} parent=0
    _
  %s7 = ssub.s32 1, %s5
  %s8 = scalar_select 0, %s7, %s5
  $region1: #{tpu_custom_call.1} parent=0
    #allocation3 [shape = 'u8[262144]{0}', space=vmem, size = 0x40000, scoped, tag = 'input window, operand 0']
    #allocation4 [shape = 's32[2]{0}', space=sflag, size = 0x8, scoped, tag = 'scoped memory for tpu_custom_call.1']
    #allocation5 [shape = 's32[2]{0}', space=sflag, size = 0x8, scoped, tag = 'scoped memory for tpu_custom_call.1']
    #allocation6 [shape = 'u8[262144]{0}', space=vmem, size = 0x40000, scoped, tag = 'input window, operand 1']
    #allocation7 [shape = 's32[2]{0}', space=sflag, size = 0x8, scoped, tag = 'scoped memory for tpu_custom_call.1']
    #allocation8 [shape = 'u8[262144]{0}', space=vmem, size = 0x40000, scoped, tag = 'input window, operand 2']
    #allocation9 [shape = 'u8[131072]{0}', space=vmem, size = 0x20000, scoped, tag = 'output window, operand 0']
    %9 = vsyncpa [#allocation4], 0
    %s10 = scalar_lea.sflag [#allocation4], 1
    %11 = vsyncpa %s10, 0
    %12 = vsyncpa [#allocation7], 0
    %s13 = scalar_lea.sflag [#allocation7], 1
    %14 = vsyncpa %s13, 0
    %15 = vsyncpa [#allocation5], 0
    %s16 = scalar_lea.sflag [#allocation5], 1
    %17 = vsyncpa %s16, 0
    loop: start=0, step=1, limit=6
    $region2: #{tpu_custom_call.1} parent=1 // loop_pre_header
      _
    $region3: #{tpu_custom_call.1} parent=1 // loop_header
      %s19 = sphi 0, %s23
      %p20 = scmp.ge.s32.totalorder %s19, 6
      %s26 = sphi 0, %s45
      %s27 = sphi 0, %s41
      %s28 = sphi 0, %s37
      %s29 = sphi 0, %s26
      %s30 = sphi 0, %s27
      %s31 = sphi 0, %s28
      %s32 = sphi 0, %s29
      %s33 = sphi 0, %s30
      %s34 = sphi 0, %s31
      %s50 = sphi 0, %s52
      %s53 = sphi 0, %s50
      %s54 = sphi 0, %s53
      %s70 = sphi 0, %s54
      %s78 = sphi 0, %s80
      %s81 = sphi 0, %s78
      %s82 = sphi 0, %s81
      %s98 = sphi 0, %s82
      %s106 = sphi 0, %s108
      %s109 = sphi 0, %s106
      %s110 = sphi 0, %s109
      %s126 = sphi 0, %s110
      %s132 = sphi 0, %s134
      %s135 = sphi 0, %s132
      %s136 = sphi 0, %s135
      %s152 = sphi 0, %s136
      %s160 = sphi 0, %s162
      %s163 = sphi 0, %s160
      %s164 = sphi 0, %s163
      %s180 = sphi 0, %s164
    $region4: #{tpu_custom_call.1} parent=1 // loop_header_branch
      %22 = sbr.rel (%p20) target = $region8
    $region5: #{tpu_custom_call.1} parent=1 // loop_body
      %s24 = ssub.s32 %s19, 1
      %s25 = ssub.s32 %s19, 2
      %s35 = sadd.s32 1, %s28
      %p36 = scmp.ge.s32.totalorder %s35, 2
      %s37 = scalar_select %p36, 0, %s35
      %s38 = sadd.s32 1, %s27
      %s39 = scalar_select %p36, %s38, %s27
      %p40 = scmp.ge.s32.totalorder %s39, 2
      %s41 = scalar_select %p40, 0, %s39
      %s42 = sadd.s32 1, %s26
      %s43 = scalar_select %p40, %s42, %s26
      %p44 = scmp.ge.s32.totalorder %s43, 1
      %s45 = scalar_select %p44, 0, %s43
      %s46 = ssub.s32 %s26, %s45
      %s47 = ssub.s32 %s28, %s37
      %s48 = sor.u32 %s46, %s47
      %p49 = scmp.eq.s32.totalorder %s48, 0
      %s51 = sadd.s32 %s50, 1
      %s52 = scalar_select %p49, %s50, %s51
      %p55 = pneg %p49
      %p56 = scmp.eq.s32.totalorder %s19, 3
      %p57 = por %p55, %p56
      %p58 = scmp.ne.s32.totalorder %s50, %s53
      %p59 = scmp.eq.s32.totalorder %s19, 0
      %p60 = por %p58, %p59
      %p61 = scmp.ne.s32.totalorder %s50, %s53
      %p62 = scmp.eq.s32.totalorder %s24, 3
      %p63 = por %p61, %p62
      %p64 = scmp.ne.s32.totalorder %s53, %s54
      %p65 = scmp.eq.s32.totalorder %s24, 0
      %p66 = por %p64, %p65
      %p67 = scmp.ne.s32.totalorder %s53, %s54
      %p68 = scmp.eq.s32.totalorder %s25, 3
      %p69 = por %p67, %p68
      %p71 = scmp.ne.s32.totalorder %s54, %s70
      %p72 = scmp.eq.s32.totalorder %s25, 0
      %p73 = por %p71, %p72
      %s74 = ssub.s32 %s26, %s45
      %s75 = ssub.s32 %s28, %s37
      %s76 = sor.u32 %s74, %s75
      %p77 = scmp.eq.s32.totalorder %s76, 0
      %s79 = sadd.s32 %s78, 1
      %s80 = scalar_select %p77, %s78, %s79
      %p83 = pneg %p77
      %p84 = scmp.eq.s32.totalorder %s19, 3
      %p85 = por %p83, %p84
      %p86 = scmp.ne.s32.totalorder %s78, %s81
      %p87 = scmp.eq.s32.totalorder %s19, 0
      %p88 = por %p86, %p87
      %p89 = scmp.ne.s32.totalorder %s78, %s81
      %p90 = scmp.eq.s32.totalorder %s24, 3
      %p91 = por %p89, %p90
      %p92 = scmp.ne.s32.totalorder %s81, %s82
      %p93 = scmp.eq.s32.totalorder %s24, 0
      %p94 = por %p92, %p93
      %p95 = scmp.ne.s32.totalorder %s81, %s82
      %p96 = scmp.eq.s32.totalorder %s25, 3
      %p97 = por %p95, %p96
      %p99 = scmp.ne.s32.totalorder %s82, %s98
      %p100 = scmp.eq.s32.totalorder %s25, 0
      %p101 = por %p99, %p100
      %s102 = ssub.s32 %s28, %s37
      %s103 = ssub.s32 %s27, %s41
      %s104 = sor.u32 %s102, %s103
      %p105 = scmp.eq.s32.totalorder %s104, 0
      %s107 = sadd.s32 %s106, 1
      %s108 = scalar_select %p105, %s106, %s107
      %p111 = pneg %p105
      %p112 = scmp.eq.s32.totalorder %s19, 3
      %p113 = por %p111, %p112
      %p114 = scmp.ne.s32.totalorder %s106, %s109
      %p115 = scmp.eq.s32.totalorder %s19, 0
      %p116 = por %p114, %p115
      %p117 = scmp.ne.s32.totalorder %s106, %s109
      %p118 = scmp.eq.s32.totalorder %s24, 3
      %p119 = por %p117, %p118
      %p120 = scmp.ne.s32.totalorder %s109, %s110
      %p121 = scmp.eq.s32.totalorder %s24, 0
      %p122 = por %p120, %p121
      %p123 = scmp.ne.s32.totalorder %s109, %s110
      %p124 = scmp.eq.s32.totalorder %s25, 3
      %p125 = por %p123, %p124
      %p127 = scmp.ne.s32.totalorder %s110, %s126
      %p128 = scmp.eq.s32.totalorder %s25, 0
      %p129 = por %p127, %p128
      %s130 = ssub.s32 %s27, %s41
      %p131 = scmp.eq.s32.totalorder %s130, 0
      %s133 = sadd.s32 %s132, 1
      %s134 = scalar_select %p131, %s132, %s133
      %p137 = pneg %p131
      %p138 = scmp.eq.s32.totalorder %s19, 3
      %p139 = por %p137, %p138
      %p140 = scmp.ne.s32.totalorder %s132, %s135
      %p141 = scmp.eq.s32.totalorder %s19, 0
      %p142 = por %p140, %p141
      %p143 = scmp.ne.s32.totalorder %s132, %s135
      %p144 = scmp.eq.s32.totalorder %s24, 3
      %p145 = por %p143, %p144
      %p146 = scmp.ne.s32.totalorder %s135, %s136
      %p147 = scmp.eq.s32.totalorder %s24, 0
      %p148 = por %p146, %p147
      %p149 = scmp.ne.s32.totalorder %s135, %s136
      %p150 = scmp.eq.s32.totalorder %s25, 3
      %p151 = por %p149, %p150
      %p153 = scmp.ne.s32.totalorder %s136, %s152
      %p154 = scmp.eq.s32.totalorder %s25, 0
      %p155 = por %p153, %p154
      %s156 = ssub.s32 %s26, %s45
      %s157 = ssub.s32 %s27, %s41
      %s158 = sor.u32 %s156, %s157
      %p159 = scmp.eq.s32.totalorder %s158, 0
      %s161 = sadd.s32 %s160, 1
      %s162 = scalar_select %p159, %s160, %s161
      %p165 = pneg %p159
      %p166 = scmp.eq.s32.totalorder %s19, 3
      %p167 = por %p165, %p166
      %p168 = scmp.ne.s32.totalorder %s160, %s163
      %p169 = scmp.eq.s32.totalorder %s19, 0
      %p170 = por %p168, %p169
      %p171 = scmp.ne.s32.totalorder %s160, %s163
      %p172 = scmp.eq.s32.totalorder %s24, 3
      %p173 = por %p171, %p172
      %p174 = scmp.ne.s32.totalorder %s163, %s164
      %p175 = scmp.eq.s32.totalorder %s24, 0
      %p176 = por %p174, %p175
      %p177 = scmp.ne.s32.totalorder %s163, %s164
      %p178 = scmp.eq.s32.totalorder %s25, 3
      %p179 = por %p177, %p178
      %p181 = scmp.ne.s32.totalorder %s164, %s180
      %p182 = scmp.eq.s32.totalorder %s25, 0
      %p183 = por %p181, %p182
      %p184 = scmp.le.s32.totalorder 1, %s19
      %p185 = scmp.lt.s32.totalorder %s19, 5
      %p186 = pnand %p184, %p185
      %p187 = pneg %p186
      // Predicated region
      $region9: #{tpu_custom_call.1} parent=5 // pred_check
        _
      $region10: #{tpu_custom_call.1} parent=5 // pred_check_branch
        %189 = sbr.rel (%p186) target = $region12
      $region11: #{tpu_custom_call.1} parent=5 // pred_region
        %s190 = ssub.s32 %s19, 1
      $region12: #{tpu_custom_call.1} parent=5 // pred_fallthru
        _
      %p191 = scmp.lt.s32.totalorder %s19, 4
      // Predicated region
      $region13: #{tpu_custom_call.1} parent=5 // pred_check
        %p192 = pneg %p191
      $region14: #{tpu_custom_call.1} parent=5 // pred_check_branch
        %194 = sbr.rel (%p192) target = $region16
      $region15: #{tpu_custom_call.1} parent=5 // pred_region
        // Predicated region
        $region17: #{tpu_custom_call.1} parent=15 // pred_check
          %p195 = pneg %p60
        $region18: #{tpu_custom_call.1} parent=15 // pred_check_branch
          %197 = sbr.rel (%p195) target = $region20
        $region19: #{tpu_custom_call.1} parent=15 // pred_region
          %s198 = sand.u32 %s50, 1
          %s199 = scalar_lea.sflag [#allocation4], %s198
          %s200 = sand.u32 %s50, 1
          %s201 = smul.addr %s200, 256
          %s202 = scalar_lea.vmem [#allocation3], %s201
          %s203 = smul.u32 16, %s26
          %s204 = smul.u32 2, %s28
          %s206 = ssub.s32 4096, 4096
          %207 = vsyncadd %s199, %s206
          %s208 = smul.addr %s203, 4
          %s209 = sadd.s32 %s204, %s208
          %s210 = smul.addr %s209, 128
          %s211 = scalar_lea.hbm %s0, %s210
          %s212 = sshll.u32 %s202, 4
          %s213 = int_to_ptr.vmem [resolvable:$true] %s212
          %218 = dma.hbm_to_vmem [thread:$0]  %s211, 4096, %s213, %s199, 512, 256, 16
        $region20: #{tpu_custom_call.1} parent=15 // pred_fallthru
          _
        // Predicated region
        $region21: #{tpu_custom_call.1} parent=15 // pred_check
          %p219 = pneg %p88
        $region22: #{tpu_custom_call.1} parent=15 // pred_check_branch
          %221 = sbr.rel (%p219) target = $region24
        $region23: #{tpu_custom_call.1} parent=15 // pred_region
          %s222 = sand.u32 %s19, 1
          %s223 = scalar_lea.sflag [#allocation7], %s222
          %s224 = sand.u32 %s78, 1
          %s225 = smul.addr %s224, 256
          %s226 = scalar_lea.vmem [#allocation6], %s225
          %s227 = smul.u32 16, %s26
          %s228 = smul.u32 2, %s28
          %s230 = ssub.s32 4096, 4096
          %231 = vsyncadd %s223, %s230
          %s232 = smul.addr %s227, 4
          %s233 = sadd.s32 %s228, %s232
          %s234 = smul.addr %s233, 128
          %s235 = scalar_lea.hbm %s1, %s234
          %s236 = sshll.u32 %s226, 4
          %s237 = int_to_ptr.vmem [resolvable:$true] %s236
          %242 = dma.hbm_to_vmem [thread:$0]  %s235, 4096, %s237, %s223, 512, 256, 16
        $region24: #{tpu_custom_call.1} parent=15 // pred_fallthru
          _
        // Predicated region
        $region25: #{tpu_custom_call.1} parent=15 // pred_check
          %p243 = pneg %p116
        $region26: #{tpu_custom_call.1} parent=15 // pred_check_branch
          %245 = sbr.rel (%p243) target = $region28
        $region27: #{tpu_custom_call.1} parent=15 // pred_region
          %s246 = sand.u32 %s19, 1
          %s247 = scalar_lea.sflag [#allocation7], %s246
          %s248 = sand.u32 %s106, 1
          %s249 = smul.addr %s248, 256
          %s250 = scalar_lea.vmem [#allocation8], %s249
          %s251 = smul.u32 32, %s28
          %s253 = ssub.s32 4096, 4096
          %254 = vsyncadd %s247, %s253
          %s255 = smul.addr %s251, 2
          %s256 = sadd.s32 %s27, %s255
          %s257 = smul.addr %s256, 128
          %s258 = scalar_lea.hbm %s2, %s257
          %s259 = sshll.u32 %s250, 4
          %s260 = int_to_ptr.vmem [resolvable:$true] %s259
          %265 = dma.hbm_to_vmem [thread:$0]  %s258, 4096, %s260, %s247, 256, 128, 8
        $region28: #{tpu_custom_call.1} parent=15 // pred_fallthru
          _
        // Predicated region
        $region29: #{tpu_custom_call.1} parent=15 // pred_check
          %p266 = pneg %p142
        $region30: #{tpu_custom_call.1} parent=15 // pred_check_branch
          %268 = sbr.rel (%p266) target = $region32
        $region31: #{tpu_custom_call.1} parent=15 // pred_region
          %p269 = scmp.lt.s32.totalorder %s27, 1
          %s270 = scalar_select %p269, %s27, 1
          %s271 = scalar_lea.vmem %s3, %s270
        $region32: #{tpu_custom_call.1} parent=15 // pred_fallthru
          _
      $region16: #{tpu_custom_call.1} parent=5 // pred_fallthru
        _
      %p272 = scmp.le.s32.totalorder 1, %s19
      %p273 = scmp.lt.s32.totalorder %s19, 5
      %p274 = pnand %p272, %p273
      %p275 = pneg %p274
      // Predicated region
      $region33: #{tpu_custom_call.1} parent=5 // pred_check
        _
      $region34: #{tpu_custom_call.1} parent=5 // pred_check_branch
        %277 = sbr.rel (%p274) target = $region36
      $region35: #{tpu_custom_call.1} parent=5 // pred_region
        %s278 = ssub.s32 %s19, 1
        %s279 = sand.u32 %s53, 1
        %s280 = scalar_lea.sflag [#allocation4], %s279
        %s281 = sand.u32 %s53, 1
        %s282 = smul.addr %s281, 256
        %s283 = scalar_lea.vmem [#allocation3], %s282
        // Predicated region
        $region37: #{tpu_custom_call.1} parent=35 // pred_check
          %p284 = pneg %p66
        $region38: #{tpu_custom_call.1} parent=35 // pred_check_branch
          %286 = sbr.rel (%p284) target = $region40
        $region39: #{tpu_custom_call.1} parent=35 // pred_region
          %287 = dma.done %s280, 4096
        $region40: #{tpu_custom_call.1} parent=35 // pred_fallthru
          _
        %s288 = sand.u32 %s24, 1
        %s289 = scalar_lea.sflag [#allocation7], %s288
        %s290 = sand.u32 %s81, 1
        %s291 = smul.addr %s290, 256
        %s292 = scalar_lea.vmem [#allocation6], %s291
        // Predicated region
        $region41: #{tpu_custom_call.1} parent=35 // pred_check
          %p293 = pneg %p94
        $region42: #{tpu_custom_call.1} parent=35 // pred_check_branch
          %295 = sbr.rel (%p293) target = $region44
        $region43: #{tpu_custom_call.1} parent=35 // pred_region
          %296 = dma.done %s289, 4096
        $region44: #{tpu_custom_call.1} parent=35 // pred_fallthru
          _
        %s297 = sand.u32 %s24, 1
        %s298 = scalar_lea.sflag [#allocation7], %s297
        %s299 = sand.u32 %s109, 1
        %s300 = smul.addr %s299, 256
        %s301 = scalar_lea.vmem [#allocation8], %s300
        // Predicated region
        $region45: #{tpu_custom_call.1} parent=35 // pred_check
          %p302 = pneg %p122
        $region46: #{tpu_custom_call.1} parent=35 // pred_check_branch
          %304 = sbr.rel (%p302) target = $region48
        $region47: #{tpu_custom_call.1} parent=35 // pred_region
          %305 = dma.done %s298, 4096
        $region48: #{tpu_custom_call.1} parent=35 // pred_fallthru
          _
        %s306 = sand.u32 %s53, 1
        %s307 = scalar_lea.sflag [#allocation4], %s306
        %s308 = sand.u32 %s53, 1
        %s309 = smul.addr %s308, 256
        %s310 = scalar_lea.vmem [#allocation3], %s309
        %p311 = pneg %p66
        %p312 = pneg %p63
        %s313 = sand.u32 %s24, 1
        %s314 = scalar_lea.sflag [#allocation7], %s313
        %s315 = sand.u32 %s81, 1
        %s316 = smul.addr %s315, 256
        %s317 = scalar_lea.vmem [#allocation6], %s316
        %p318 = pneg %p94
        %p319 = pneg %p91
        %s320 = sand.u32 %s24, 1
        %s321 = scalar_lea.sflag [#allocation7], %s320
        %s322 = sand.u32 %s109, 1
        %s323 = smul.addr %s322, 256
        %s324 = scalar_lea.vmem [#allocation8], %s323
        %p325 = pneg %p122
        %p326 = pneg %p119
        %p327 = scmp.lt.s32.totalorder %s30, 1
        %s328 = scalar_select %p327, %s30, 1
        %s329 = scalar_lea.vmem %s3, %s328
        %p330 = pneg %p148
        %p331 = pneg %p145
        %p332 = pneg %p176
        %p333 = pneg %p173
        %s334 = sand.u32 %s163, 1
        %s335 = scalar_lea.sflag [#allocation5], %s334
        %s336 = sand.u32 %s163, 1
        %s337 = smul.addr %s336, 128
        %s338 = scalar_lea.vmem [#allocation9], %s337
        %s339 = smul.u32 16, %s29
        %s340 = smul.u32 2, %s31
        %s341 = smul.u32 16, %s29
        %s342 = smul.u32 2, %s31
        %s343 = smul.u32 32, %s31
        %p344 = scmp.lt.s32.totalorder %s30, 1
        %s345 = scalar_select %p344, %s30, 1
        %s346 = scalar_lea.vmem %s3, %s345
        %s347 = smul.u32 16, %s29
        %p348 = scmp.eq.s32.totalorder %s31, 0
        // Predicated region
        $region49: #{tpu_custom_call.1} parent=35 // pred_check
          %p349 = pneg %p348
        $region50: #{tpu_custom_call.1} parent=35 // pred_check_branch
          %351 = sbr.rel (%p349) target = $region52
        $region51: #{tpu_custom_call.1} parent=35 // pred_region
          %352 = vst [vmem:[#allocation2] sm:$0xff] 0.0
          %353 = vst [vmem:[#allocation2 + $0x8] sm:$0xff] 0.0
          %354 = vst [vmem:[#allocation2 + $0x10] sm:$0xff] 0.0
          %355 = vst [vmem:[#allocation2 + $0x18] sm:$0xff] 0.0
          %356 = vst [vmem:[#allocation2 + $0x20] sm:$0xff] 0.0
          %357 = vst [vmem:[#allocation2 + $0x28] sm:$0xff] 0.0
          %358 = vst [vmem:[#allocation2 + $0x30] sm:$0xff] 0.0
          %359 = vst [vmem:[#allocation2 + $0x38] sm:$0xff] 0.0
          %360 = vst [vmem:[#allocation2 + $0x40] sm:$0xff] 0.0
          %361 = vst [vmem:[#allocation2 + $0x48] sm:$0xff] 0.0
          %362 = vst [vmem:[#allocation2 + $0x50] sm:$0xff] 0.0
          %363 = vst [vmem:[#allocation2 + $0x58] sm:$0xff] 0.0
          %364 = vst [vmem:[#allocation2 + $0x60] sm:$0xff] 0.0
          %365 = vst [vmem:[#allocation2 + $0x68] sm:$0xff] 0.0
          %366 = vst [vmem:[#allocation2 + $0x70] sm:$0xff] 0.0
          %367 = vst [vmem:[#allocation2 + $0x78] sm:$0xff] 0.0
        $region52: #{tpu_custom_call.1} parent=35 // pred_fallthru
          _
        %v368 = vld [vmem:[%s283] sm:$0xff]
        %v369 = vld [vmem:[%s283 + $0x8] sm:$0xff]
        %v370 = vld [vmem:[%s283 + $0x10] sm:$0xff]
        %v371 = vld [vmem:[%s283 + $0x18] sm:$0xff]
        %v372 = vld [vmem:[%s283 + $0x20] sm:$0xff]
        %v373 = vld [vmem:[%s283 + $0x28] sm:$0xff]
        %v374 = vld [vmem:[%s283 + $0x30] sm:$0xff]
        %v375 = vld [vmem:[%s283 + $0x38] sm:$0xff]
        %v376 = vld [vmem:[%s283 + $0x40] sm:$0xff]
        %v377 = vld [vmem:[%s283 + $0x48] sm:$0xff]
        %v378 = vld [vmem:[%s283 + $0x50] sm:$0xff]
        %v379 = vld [vmem:[%s283 + $0x58] sm:$0xff]
        %v380 = vld [vmem:[%s283 + $0x60] sm:$0xff]
        %v381 = vld [vmem:[%s283 + $0x68] sm:$0xff]
        %v382 = vld [vmem:[%s283 + $0x70] sm:$0xff]
        %v383 = vld [vmem:[%s283 + $0x78] sm:$0xff]
        %v384 = vld [vmem:[%s283 + $0x80] sm:$0xff]
        %v385 = vld [vmem:[%s283 + $0x88] sm:$0xff]
        %v386 = vld [vmem:[%s283 + $0x90] sm:$0xff]
        %v387 = vld [vmem:[%s283 + $0x98] sm:$0xff]
        %v388 = vld [vmem:[%s283 + $0xa0] sm:$0xff]
        %v389 = vld [vmem:[%s283 + $0xa8] sm:$0xff]
        %v390 = vld [vmem:[%s283 + $0xb0] sm:$0xff]
        %v391 = vld [vmem:[%s283 + $0xb8] sm:$0xff]
        %v392 = vld [vmem:[%s283 + $0xc0] sm:$0xff]
        %v393 = vld [vmem:[%s283 + $0xc8] sm:$0xff]
        %v394 = vld [vmem:[%s283 + $0xd0] sm:$0xff]
        %v395 = vld [vmem:[%s283 + $0xd8] sm:$0xff]
        %v396 = vld [vmem:[%s283 + $0xe0] sm:$0xff]
        %v397 = vld [vmem:[%s283 + $0xe8] sm:$0xff]
        %v398 = vld [vmem:[%s283 + $0xf0] sm:$0xff]
        %v399 = vld [vmem:[%s283 + $0xf8] sm:$0xff]
        %v400 = vld [vmem:[%s292] sm:$0xff]
        %v401 = vld [vmem:[%s292 + $0x8] sm:$0xff]
        %v402 = vld [vmem:[%s292 + $0x10] sm:$0xff]
        %v403 = vld [vmem:[%s292 + $0x18] sm:$0xff]
        %v404 = vld [vmem:[%s292 + $0x20] sm:$0xff]
        %v405 = vld [vmem:[%s292 + $0x28] sm:$0xff]
        %v406 = vld [vmem:[%s292 + $0x30] sm:$0xff]
        %v407 = vld [vmem:[%s292 + $0x38] sm:$0xff]
        %v408 = vld [vmem:[%s292 + $0x40] sm:$0xff]
        %v409 = vld [vmem:[%s292 + $0x48] sm:$0xff]
        %v410 = vld [vmem:[%s292 + $0x50] sm:$0xff]
        %v411 = vld [vmem:[%s292 + $0x58] sm:$0xff]
        %v412 = vld [vmem:[%s292 + $0x60] sm:$0xff]
        %v413 = vld [vmem:[%s292 + $0x68] sm:$0xff]
        %v414 = vld [vmem:[%s292 + $0x70] sm:$0xff]
        %v415 = vld [vmem:[%s292 + $0x78] sm:$0xff]
        %v416 = vld [vmem:[%s292 + $0x80] sm:$0xff]
        %v417 = vld [vmem:[%s292 + $0x88] sm:$0xff]
        %v418 = vld [vmem:[%s292 + $0x90] sm:$0xff]
        %v419 = vld [vmem:[%s292 + $0x98] sm:$0xff]
        %v420 = vld [vmem:[%s292 + $0xa0] sm:$0xff]
        %v421 = vld [vmem:[%s292 + $0xa8] sm:$0xff]
        %v422 = vld [vmem:[%s292 + $0xb0] sm:$0xff]
        %v423 = vld [vmem:[%s292 + $0xb8] sm:$0xff]
        %v424 = vld [vmem:[%s292 + $0xc0] sm:$0xff]
        %v425 = vld [vmem:[%s292 + $0xc8] sm:$0xff]
        %v426 = vld [vmem:[%s292 + $0xd0] sm:$0xff]
        %v427 = vld [vmem:[%s292 + $0xd8] sm:$0xff]
        %v428 = vld [vmem:[%s292 + $0xe0] sm:$0xff]
        %v429 = vld [vmem:[%s292 + $0xe8] sm:$0xff]
        %v430 = vld [vmem:[%s292 + $0xf0] sm:$0xff]
        %v431 = vld [vmem:[%s292 + $0xf8] sm:$0xff]
        %vm432 = vcmp.ge.u32.totalorder %v400, 429496730
        %vm433 = vcmp.ge.u32.totalorder %v401, 429496730
        %vm434 = vcmp.ge.u32.totalorder %v402, 429496730
        %vm435 = vcmp.ge.u32.totalorder %v403, 429496730
        %vm436 = vcmp.ge.u32.totalorder %v404, 429496730
        %vm437 = vcmp.ge.u32.totalorder %v405, 429496730
        %vm438 = vcmp.ge.u32.totalorder %v406, 429496730
        %vm439 = vcmp.ge.u32.totalorder %v407, 429496730
        %vm440 = vcmp.ge.u32.totalorder %v408, 429496730
        %vm441 = vcmp.ge.u32.totalorder %v409, 429496730
        %vm442 = vcmp.ge.u32.totalorder %v410, 429496730
        %vm443 = vcmp.ge.u32.totalorder %v411, 429496730
        %vm444 = vcmp.ge.u32.totalorder %v412, 429496730
        %vm445 = vcmp.ge.u32.totalorder %v413, 429496730
        %vm446 = vcmp.ge.u32.totalorder %v414, 429496730
        %vm447 = vcmp.ge.u32.totalorder %v415, 429496730
        %vm448 = vcmp.ge.u32.totalorder %v416, 429496730
        %vm449 = vcmp.ge.u32.totalorder %v417, 429496730
        %vm450 = vcmp.ge.u32.totalorder %v418, 429496730
        %vm451 = vcmp.ge.u32.totalorder %v419, 429496730
        %vm452 = vcmp.ge.u32.totalorder %v420, 429496730
        %vm453 = vcmp.ge.u32.totalorder %v421, 429496730
        %vm454 = vcmp.ge.u32.totalorder %v422, 429496730
        %vm455 = vcmp.ge.u32.totalorder %v423, 429496730
        %vm456 = vcmp.ge.u32.totalorder %v424, 429496730
        %vm457 = vcmp.ge.u32.totalorder %v425, 429496730
        %vm458 = vcmp.ge.u32.totalorder %v426, 429496730
        %vm459 = vcmp.ge.u32.totalorder %v427, 429496730
        %vm460 = vcmp.ge.u32.totalorder %v428, 429496730
        %vm461 = vcmp.ge.u32.totalorder %v429, 429496730
        %vm462 = vcmp.ge.u32.totalorder %v430, 429496730
        %vm463 = vcmp.ge.u32.totalorder %v431, 429496730
        %v464 = vsel %vm432, %v368, 0.0
        %v465 = vsel %vm433, %v369, 0.0
        %v466 = vsel %vm434, %v370, 0.0
        %v467 = vsel %vm435, %v371, 0.0
        %v468 = vsel %vm436, %v372, 0.0
        %v469 = vsel %vm437, %v373, 0.0
        %v470 = vsel %vm438, %v374, 0.0
        %v471 = vsel %vm439, %v375, 0.0
        %v472 = vsel %vm440, %v376, 0.0
        %v473 = vsel %vm441, %v377, 0.0
        %v474 = vsel %vm442, %v378, 0.0
        %v475 = vsel %vm443, %v379, 0.0
        %v476 = vsel %vm444, %v380, 0.0
        %v477 = vsel %vm445, %v381, 0.0
        %v478 = vsel %vm446, %v382, 0.0
        %v479 = vsel %vm447, %v383, 0.0
        %v480 = vsel %vm448, %v384, 0.0
        %v481 = vsel %vm449, %v385, 0.0
        %v482 = vsel %vm450, %v386, 0.0
        %v483 = vsel %vm451, %v387, 0.0
        %v484 = vsel %vm452, %v388, 0.0
        %v485 = vsel %vm453, %v389, 0.0
        %v486 = vsel %vm454, %v390, 0.0
        %v487 = vsel %vm455, %v391, 0.0
        %v488 = vsel %vm456, %v392, 0.0
        %v489 = vsel %vm457, %v393, 0.0
        %v490 = vsel %vm458, %v394, 0.0
        %v491 = vsel %vm459, %v395, 0.0
        %v492 = vsel %vm460, %v396, 0.0
        %v493 = vsel %vm461, %v397, 0.0
        %v494 = vsel %vm462, %v398, 0.0
        %v495 = vsel %vm463, %v399, 0.0
        %v496 = vld [vmem:[#allocation2] sm:$0xff]
        %v497 = vld [vmem:[#allocation2 + $0x8] sm:$0xff]
        %v498 = vld [vmem:[#allocation2 + $0x10] sm:$0xff]
        %v499 = vld [vmem:[#allocation2 + $0x18] sm:$0xff]
        %v500 = vld [vmem:[#allocation2 + $0x20] sm:$0xff]
        %v501 = vld [vmem:[#allocation2 + $0x28] sm:$0xff]
        %v502 = vld [vmem:[#allocation2 + $0x30] sm:$0xff]
        %v503 = vld [vmem:[#allocation2 + $0x38] sm:$0xff]
        %v504 = vld [vmem:[#allocation2 + $0x40] sm:$0xff]
        %v505 = vld [vmem:[#allocation2 + $0x48] sm:$0xff]
        %v506 = vld [vmem:[#allocation2 + $0x50] sm:$0xff]
        %v507 = vld [vmem:[#allocation2 + $0x58] sm:$0xff]
        %v508 = vld [vmem:[#allocation2 + $0x60] sm:$0xff]
        %v509 = vld [vmem:[#allocation2 + $0x68] sm:$0xff]
        %v510 = vld [vmem:[#allocation2 + $0x70] sm:$0xff]
        %v511 = vld [vmem:[#allocation2 + $0x78] sm:$0xff]
        %v512 = vld [vmem:[%s301] sm:$0xff]
        %v513 = vld [vmem:[%s301 + $0x8] sm:$0xff]
        %v514 = vld [vmem:[%s301 + $0x10] sm:$0xff]
        %v515 = vld [vmem:[%s301 + $0x18] sm:$0xff]
        %v516 = vld [vmem:[%s301 + $0x20] sm:$0xff]
        %v517 = vld [vmem:[%s301 + $0x28] sm:$0xff]
        %v518 = vld [vmem:[%s301 + $0x30] sm:$0xff]
        %v519 = vld [vmem:[%s301 + $0x38] sm:$0xff]
        %v520 = vld [vmem:[%s301 + $0x40] sm:$0xff]
        %v521 = vld [vmem:[%s301 + $0x48] sm:$0xff]
        %v522 = vld [vmem:[%s301 + $0x50] sm:$0xff]
        %v523 = vld [vmem:[%s301 + $0x58] sm:$0xff]
        %v524 = vld [vmem:[%s301 + $0x60] sm:$0xff]
        %v525 = vld [vmem:[%s301 + $0x68] sm:$0xff]
        %v526 = vld [vmem:[%s301 + $0x70] sm:$0xff]
        %v527 = vld [vmem:[%s301 + $0x78] sm:$0xff]
        %v528 = vld [vmem:[%s301 + $0x80] sm:$0xff]
        %v529 = vld [vmem:[%s301 + $0x88] sm:$0xff]
        %v530 = vld [vmem:[%s301 + $0x90] sm:$0xff]
        %v531 = vld [vmem:[%s301 + $0x98] sm:$0xff]
        %v532 = vld [vmem:[%s301 + $0xa0] sm:$0xff]
        %v533 = vld [vmem:[%s301 + $0xa8] sm:$0xff]
        %v534 = vld [vmem:[%s301 + $0xb0] sm:$0xff]
        %v535 = vld [vmem:[%s301 + $0xb8] sm:$0xff]
        %v536 = vld [vmem:[%s301 + $0xc0] sm:$0xff]
        %v537 = vld [vmem:[%s301 + $0xc8] sm:$0xff]
        %v538 = vld [vmem:[%s301 + $0xd0] sm:$0xff]
        %v539 = vld [vmem:[%s301 + $0xd8] sm:$0xff]
        %v540 = vld [vmem:[%s301 + $0xe0] sm:$0xff]
        %v541 = vld [vmem:[%s301 + $0xe8] sm:$0xff]
        %v542 = vld [vmem:[%s301 + $0xf0] sm:$0xff]
        %v543 = vld [vmem:[%s301 + $0xf8] sm:$0xff]
        %544 = vmatprep.subr.mxu0 0.0
        %545 = vmatpush1.msra.mxu0 %v512
        %546 = vmatprep.subr.mxu0 0.0
        %547 = vmatpush1.msra.mxu0 %v513
        %548 = vmatprep.subr.mxu0 0.0
        %549 = vmatpush1.msra.mxu0 %v514
        %550 = vmatprep.subr.mxu0 0.0
        %551 = vmatpush1.msra.mxu0 %v515
        %552 = vmatprep.subr.mxu0 0.0
        %553 = vmatpush1.msra.mxu0 %v516
        %554 = vmatprep.subr.mxu0 0.0
        %555 = vmatpush1.msra.mxu0 %v517
        %556 = vmatprep.subr.mxu0 0.0
        %557 = vmatpush1.msra.mxu0 %v518
        %558 = vmatprep.subr.mxu0 0.0
        %559 = vmatpush1.msra.mxu0 %v519
        %560 = vmatprep.subr.mxu0 0.0
        %561 = vmatpush1.msra.mxu0 %v520
        %562 = vmatprep.subr.mxu0 0.0
        %563 = vmatpush1.msra.mxu0 %v521
        %564 = vmatprep.subr.mxu0 0.0
        %565 = vmatpush1.msra.mxu0 %v522
        %566 = vmatprep.subr.mxu0 0.0
        %567 = vmatpush1.msra.mxu0 %v523
        %568 = vmatprep.subr.mxu0 0.0
        %569 = vmatpush1.msra.mxu0 %v524
        %570 = vmatprep.subr.mxu0 0.0
        %571 = vmatpush1.msra.mxu0 %v525
        %572 = vmatprep.subr.mxu0 0.0
        %573 = vmatpush1.msra.mxu0 %v526
        %574 = vmatprep.subr.mxu0 0.0
        %575 = vmatpush1.msra.mxu0 %v527
        %576 = vmatprep.subr.mxu0 0.0
        %577 = vmatpush1.msra.mxu0 %v528
        %578 = vmatprep.subr.mxu0 0.0
        %579 = vmatpush1.msra.mxu0 %v529
        %580 = vmatprep.subr.mxu0 0.0
        %581 = vmatpush1.msra.mxu0 %v530
        %582 = vmatprep.subr.mxu0 0.0
        %583 = vmatpush1.msra.mxu0 %v531
        %584 = vmatprep.subr.mxu0 0.0
        %585 = vmatpush1.msra.mxu0 %v532
        %586 = vmatprep.subr.mxu0 0.0
        %587 = vmatpush1.msra.mxu0 %v533
        %588 = vmatprep.subr.mxu0 0.0
        %589 = vmatpush1.msra.mxu0 %v534
        %590 = vmatprep.subr.mxu0 0.0
        %591 = vmatpush1.msra.mxu0 %v535
        %592 = vmatprep.subr.mxu0 0.0
        %593 = vmatpush1.msra.mxu0 %v536
        %594 = vmatprep.subr.mxu0 0.0
        %595 = vmatpush1.msra.mxu0 %v537
        %596 = vmatprep.subr.mxu0 0.0
        %597 = vmatpush1.msra.mxu0 %v538
        %598 = vmatprep.subr.mxu0 0.0
        %599 = vmatpush1.msra.mxu0 %v539
        %600 = vmatprep.subr.mxu0 0.0
        %601 = vmatpush1.msra.mxu0 %v540
        %602 = vmatprep.subr.mxu0 0.0
        %603 = vmatpush1.msra.mxu0 %v541
        %604 = vmatprep.subr.mxu0 0.0
        %605 = vmatpush1.msra.mxu0 %v542
        %606 = vmatprep.subr.mxu0 0.0
        %607 = vmatpush1.msra.mxu0 %v543
        %608 = vmatprep.mubr.f32.mxu0 %v465
        %609 = vmatmul.mubr.f32.gmra.mrb[0].mxu0 %v464
        %v610 = vpop.f32.mrb[0].mxu0
        %v611 = vadd.f32 0.0, %v610
        %v612 = vpop.f32.mrb[0].mxu0
        %613 = vmatprep.mubr.f32.mxu0 %v467
        %614 = vmatmul.mubr.f32.gmra.mrb[0].mxu0 %v466
        %v615 = vpop.f32.mrb[0].mxu0
        %v616 = vadd.f32 0.0, %v615
        %v617 = vpop.f32.mrb[0].mxu0
        %618 = vmatprep.mubr.f32.mxu0 %v469
        %619 = vmatmul.mubr.f32.gmra.mrb[0].mxu0 %v468
        %v620 = vpop.f32.mrb[0].mxu0
        %v621 = vadd.f32 0.0, %v620
        %v622 = vpop.f32.mrb[0].mxu0
        %623 = vmatprep.mubr.f32.mxu0 %v471
        %624 = vmatmul.mubr.f32.gmra.mrb[0].mxu0 %v470
        %v625 = vpop.f32.mrb[0].mxu0
        %v626 = vadd.f32 0.0, %v625
        %v627 = vpop.f32.mrb[0].mxu0
        %628 = vmatprep.mubr.f32.mxu0 %v473
        %629 = vmatmul.mubr.f32.gmra.mrb[0].mxu0 %v472
        %v630 = vpop.f32.mrb[0].mxu0
        %v631 = vadd.f32 0.0, %v630
        %v632 = vpop.f32.mrb[0].mxu0
        %633 = vmatprep.mubr.f32.mxu0 %v475
        %634 = vmatmul.mubr.f32.gmra.mrb[0].mxu0 %v474
        %v635 = vpop.f32.mrb[0].mxu0
        %v636 = vadd.f32 0.0, %v635
        %v637 = vpop.f32.mrb[0].mxu0
        %638 = vmatprep.mubr.f32.mxu0 %v477
        %639 = vmatmul.mubr.f32.gmra.mrb[0].mxu0 %v476
        %v640 = vpop.f32.mrb[0].mxu0
        %v641 = vadd.f32 0.0, %v640
        %v642 = vpop.f32.mrb[0].mxu0
        %643 = vmatprep.mubr.f32.mxu0 %v479
        %644 = vmatmul.mubr.f32.gmra.mrb[0].mxu0 %v478
        %v645 = vpop.f32.mrb[0].mxu0
        %v646 = vadd.f32 0.0, %v645
        %v647 = vpop.f32.mrb[0].mxu0
        %648 = vmatprep.mubr.f32.mxu0 %v481
        %649 = vmatmul.mubr.f32.gmra.mrb[0].mxu0 %v480
        %v650 = vpop.f32.mrb[0].mxu0
        %v651 = vadd.f32 0.0, %v650
        %v652 = vpop.f32.mrb[0].mxu0
        %653 = vmatprep.mubr.f32.mxu0 %v483
        %654 = vmatmul.mubr.f32.gmra.mrb[0].mxu0 %v482
        %v655 = vpop.f32.mrb[0].mxu0
        %v656 = vadd.f32 0.0, %v655
        %v657 = vpop.f32.mrb[0].mxu0
        %658 = vmatprep.mubr.f32.mxu0 %v485
        %659 = vmatmul.mubr.f32.gmra.mrb[0].mxu0 %v484
        %v660 = vpop.f32.mrb[0].mxu0
        %v661 = vadd.f32 0.0, %v660
        %v662 = vpop.f32.mrb[0].mxu0
        %663 = vmatprep.mubr.f32.mxu0 %v487
        %664 = vmatmul.mubr.f32.gmra.mrb[0].mxu0 %v486
        %v665 = vpop.f32.mrb[0].mxu0
        %v666 = vadd.f32 0.0, %v665
        %v667 = vpop.f32.mrb[0].mxu0
        %668 = vmatprep.mubr.f32.mxu0 %v489
        %669 = vmatmul.mubr.f32.gmra.mrb[0].mxu0 %v488
        %v670 = vpop.f32.mrb[0].mxu0
        %v671 = vadd.f32 0.0, %v670
        %v672 = vpop.f32.mrb[0].mxu0
        %673 = vmatprep.mubr.f32.mxu0 %v491
        %674 = vmatmul.mubr.f32.gmra.mrb[0].mxu0 %v490
        %v675 = vpop.f32.mrb[0].mxu0
        %v676 = vadd.f32 0.0, %v675
        %v677 = vpop.f32.mrb[0].mxu0
        %678 = vmatprep.mubr.f32.mxu0 %v493
        %679 = vmatmul.mubr.f32.gmra.mrb[0].mxu0 %v492
        %v680 = vpop.f32.mrb[0].mxu0
        %v681 = vadd.f32 0.0, %v680
        %v682 = vpop.f32.mrb[0].mxu0
        %683 = vmatprep.mubr.f32.mxu0 %v495
        %684 = vmatmul.mubr.f32.gmra.mrb[0].mxu0 %v494
        %v685 = vpop.f32.mrb[0].mxu0
        %v686 = vadd.f32 0.0, %v685
        %v687 = vpop.f32.mrb[0].mxu0
        %688 = vdwg.mxu0
        %v689 = vadd.f32 %v496, %v611
        %v690 = vadd.f32 %v497, %v616
        %v691 = vadd.f32 %v498, %v621
        %v692 = vadd.f32 %v499, %v626
        %v693 = vadd.f32 %v500, %v631
        %v694 = vadd.f32 %v501, %v636
        %v695 = vadd.f32 %v502, %v641
        %v696 = vadd.f32 %v503, %v646
        %v697 = vadd.f32 %v504, %v651
        %v698 = vadd.f32 %v505, %v656
        %v699 = vadd.f32 %v506, %v661
        %v700 = vadd.f32 %v507, %v666
        %v701 = vadd.f32 %v508, %v671
        %v702 = vadd.f32 %v509, %v676
        %v703 = vadd.f32 %v510, %v681
        %v704 = vadd.f32 %v511, %v686
        %705 = vst [vmem:[#allocation2] sm:$0xff] %v689
        %706 = vst [vmem:[#allocation2 + $0x8] sm:$0xff] %v690
        %707 = vst [vmem:[#allocation2 + $0x10] sm:$0xff] %v691
        %708 = vst [vmem:[#allocation2 + $0x18] sm:$0xff] %v692
        %709 = vst [vmem:[#allocation2 + $0x20] sm:$0xff] %v693
        %710 = vst [vmem:[#allocation2 + $0x28] sm:$0xff] %v694
        %711 = vst [vmem:[#allocation2 + $0x30] sm:$0xff] %v695
        %712 = vst [vmem:[#allocation2 + $0x38] sm:$0xff] %v696
        %713 = vst [vmem:[#allocation2 + $0x40] sm:$0xff] %v697
        %714 = vst [vmem:[#allocation2 + $0x48] sm:$0xff] %v698
        %715 = vst [vmem:[#allocation2 + $0x50] sm:$0xff] %v699
        %716 = vst [vmem:[#allocation2 + $0x58] sm:$0xff] %v700
        %717 = vst [vmem:[#allocation2 + $0x60] sm:$0xff] %v701
        %718 = vst [vmem:[#allocation2 + $0x68] sm:$0xff] %v702
        %719 = vst [vmem:[#allocation2 + $0x70] sm:$0xff] %v703
        %720 = vst [vmem:[#allocation2 + $0x78] sm:$0xff] %v704
        %p721 = scmp.eq.s32.totalorder %s31, 1
        // Predicated region
        $region53: #{tpu_custom_call.1} parent=35 // pred_check
          %p722 = pneg %p721
        $region54: #{tpu_custom_call.1} parent=35 // pred_check_branch
          %724 = sbr.rel (%p722) target = $region56
        $region55: #{tpu_custom_call.1} parent=35 // pred_region
          %v725 = vld [vmem:[#allocation2] sm:$0xff]
          %v726 = vld [vmem:[#allocation2 + $0x8] sm:$0xff]
          %v727 = vld [vmem:[#allocation2 + $0x10] sm:$0xff]
          %v728 = vld [vmem:[#allocation2 + $0x18] sm:$0xff]
          %v729 = vld [vmem:[#allocation2 + $0x20] sm:$0xff]
          %v730 = vld [vmem:[#allocation2 + $0x28] sm:$0xff]
          %v731 = vld [vmem:[#allocation2 + $0x30] sm:$0xff]
          %v732 = vld [vmem:[#allocation2 + $0x38] sm:$0xff]
          %v733 = vld [vmem:[#allocation2 + $0x40] sm:$0xff]
          %v734 = vld [vmem:[#allocation2 + $0x48] sm:$0xff]
          %v735 = vld [vmem:[#allocation2 + $0x50] sm:$0xff]
          %v736 = vld [vmem:[#allocation2 + $0x58] sm:$0xff]
          %v737 = vld [vmem:[#allocation2 + $0x60] sm:$0xff]
          %v738 = vld [vmem:[#allocation2 + $0x68] sm:$0xff]
          %v739 = vld [vmem:[#allocation2 + $0x70] sm:$0xff]
          %v740 = vld [vmem:[#allocation2 + $0x78] sm:$0xff]
          %v741 = vmul.f32 %v725, 1.1111112
          %v742 = vmul.f32 %v726, 1.1111112
          %v743 = vmul.f32 %v727, 1.1111112
          %v744 = vmul.f32 %v728, 1.1111112
          %v745 = vmul.f32 %v729, 1.1111112
          %v746 = vmul.f32 %v730, 1.1111112
          %v747 = vmul.f32 %v731, 1.1111112
          %v748 = vmul.f32 %v732, 1.1111112
          %v749 = vmul.f32 %v733, 1.1111112
          %v750 = vmul.f32 %v734, 1.1111112
          %v751 = vmul.f32 %v735, 1.1111112
          %v752 = vmul.f32 %v736, 1.1111112
          %v753 = vmul.f32 %v737, 1.1111112
          %v754 = vmul.f32 %v738, 1.1111112
          %v755 = vmul.f32 %v739, 1.1111112
          %v756 = vmul.f32 %v740, 1.1111112
          %v757 = vld [vmem:[%s346] sm:$0x1]
          %v759 = vlaneseq
          %v760 = vshrl.u32 %v759, 7
          %v761 = vsub.s32 0, %v760
          %v762 = vrot.slane %v757, %v761
          %v764 = vadd.f32 %v741, %v762
          %v765 = vadd.f32 %v742, %v762
          %v766 = vadd.f32 %v743, %v762
          %v767 = vadd.f32 %v744, %v762
          %v768 = vadd.f32 %v745, %v762
          %v769 = vadd.f32 %v746, %v762
          %v770 = vadd.f32 %v747, %v762
          %v771 = vadd.f32 %v748, %v762
          %v772 = vadd.f32 %v749, %v762
          %v773 = vadd.f32 %v750, %v762
          %v774 = vadd.f32 %v751, %v762
          %v775 = vadd.f32 %v752, %v762
          %v776 = vadd.f32 %v753, %v762
          %v777 = vadd.f32 %v754, %v762
          %v778 = vadd.f32 %v755, %v762
          %v779 = vadd.f32 %v756, %v762
          %780 = vst [vmem:[%s338] sm:$0xff] %v764
          %781 = vst [vmem:[%s338 + $0x8] sm:$0xff] %v765
          %782 = vst [vmem:[%s338 + $0x10] sm:$0xff] %v766
          %783 = vst [vmem:[%s338 + $0x18] sm:$0xff] %v767
          %784 = vst [vmem:[%s338 + $0x20] sm:$0xff] %v768
          %785 = vst [vmem:[%s338 + $0x28] sm:$0xff] %v769
          %786 = vst [vmem:[%s338 + $0x30] sm:$0xff] %v770
          %787 = vst [vmem:[%s338 + $0x38] sm:$0xff] %v771
          %788 = vst [vmem:[%s338 + $0x40] sm:$0xff] %v772
          %789 = vst [vmem:[%s338 + $0x48] sm:$0xff] %v773
          %790 = vst [vmem:[%s338 + $0x50] sm:$0xff] %v774
          %791 = vst [vmem:[%s338 + $0x58] sm:$0xff] %v775
          %792 = vst [vmem:[%s338 + $0x60] sm:$0xff] %v776
          %793 = vst [vmem:[%s338 + $0x68] sm:$0xff] %v777
          %794 = vst [vmem:[%s338 + $0x70] sm:$0xff] %v778
          %795 = vst [vmem:[%s338 + $0x78] sm:$0xff] %v779
        $region56: #{tpu_custom_call.1} parent=35 // pred_fallthru
          _
        %s796 = sand.u32 %s163, 1
        %s797 = scalar_lea.sflag [#allocation5], %s796
        %s798 = sand.u32 %s163, 1
        %s799 = smul.addr %s798, 128
        %s800 = scalar_lea.vmem [#allocation9], %s799
        // Predicated region
        $region57: #{tpu_custom_call.1} parent=35 // pred_check
          %p801 = pneg %p173
        $region58: #{tpu_custom_call.1} parent=35 // pred_check_branch
          %803 = sbr.rel (%p801) target = $region60
        $region59: #{tpu_custom_call.1} parent=35 // pred_region
          %s804 = smul.u32 16, %s29
          %s806 = ssub.s32 2048, 2048
          %807 = vsyncadd %s797, %s806
          %s808 = smul.addr %s804, 2
          %s809 = sadd.s32 %s30, %s808
          %s810 = smul.addr %s809, 128
          %s811 = scalar_lea.hbm %s4, %s810
          %s812 = sshll.u32 %s800, 4
          %s813 = int_to_ptr.vmem [resolvable:$true] %s812
          %818 = dma.vmem_to_hbm [thread:$0]  %s813, 2048, %s811, %s797, 128, 256, 8
        $region60: #{tpu_custom_call.1} parent=35 // pred_fallthru
          _
      $region36: #{tpu_custom_call.1} parent=5 // pred_fallthru
        _
      %p819 = scmp.le.s32.totalorder 2, %s19
      // Predicated region
      $region61: #{tpu_custom_call.1} parent=5 // pred_check
        %p820 = pneg %p819
      $region62: #{tpu_custom_call.1} parent=5 // pred_check_branch
        %822 = sbr.rel (%p820) target = $region64
      $region63: #{tpu_custom_call.1} parent=5 // pred_region
        %s823 = ssub.s32 %s19, 2
        // Predicated region
        $region65: #{tpu_custom_call.1} parent=63 // pred_check
          %p824 = pneg %p179
        $region66: #{tpu_custom_call.1} parent=63 // pred_check_branch
          %826 = sbr.rel (%p824) target = $region68
        $region67: #{tpu_custom_call.1} parent=63 // pred_region
          %s827 = sand.u32 %s164, 1
          %s828 = scalar_lea.sflag [#allocation5], %s827
          %s829 = sand.u32 %s164, 1
          %s830 = smul.addr %s829, 128
          %s831 = scalar_lea.vmem [#allocation9], %s830
          %832 = dma.done %s828, 2048
        $region68: #{tpu_custom_call.1} parent=63 // pred_fallthru
          _
      $region64: #{tpu_custom_call.1} parent=5 // pred_fallthru
        _
    $region6: #{tpu_custom_call.1} parent=1 // loop_footer
      %s23 = sadd.s32 1, %s19
    $region7: #{tpu_custom_call.1} parent=1 // loop_footer_branch
      %18 = sbr.rel target = $region3
    $region8: #{tpu_custom_call.1} parent=1 // loop_exit
      _
    %833 = vsyncpa [#allocation4], 1
    %s834 = scalar_lea.sflag [#allocation4], 1
    %835 = vsyncpa %s834, 1
    %836 = vsyncpa [#allocation7], 1
    %s837 = scalar_lea.sflag [#allocation7], 1
    %838 = vsyncpa %s837, 1
    %839 = vsyncpa [#allocation5], 1
    %s840 = scalar_lea.sflag [#allocation5], 1
    %841 = vsyncpa %s840, 1

</llo_original>
